<compile_context>
chip_gen: v6e
topology: v6e:2x2x1
jax: 0.10.0
libtpu: 0.0.40
codegen_flags: <defaults>
</compile_context>

<pallas_src>
import jax
import jax.numpy as jnp
from jax.experimental import pallas as pl
from jax.experimental.pallas import tpu as pltpu


def _round_up(n: int, m: int) -> int:
    return ((n + m - 1) // m) * m


def _nn2_kernel(x_ref, w1_ref, b1_ref, w2_ref, b2_ref, o_ref):
    # Layer 1: (tb, d_in) @ (d_in, 128) on the MXU, f32 accumulation.
    h = jnp.dot(x_ref[...], w1_ref[...], preferred_element_type=jnp.float32)
    h = h + b1_ref[...]
    # sigmoid(z) = 0.5 * tanh(0.5 * z) + 0.5  -- single EUP op per element.
    h = 0.5 * jnp.tanh(0.5 * h) + 0.5
    # Layer 2: (tb, 128) @ (128, 1) -> (tb, 1). Natural MXU orientation (no h transpose).
    y = jnp.dot(h, w2_ref[...], preferred_element_type=jnp.float32)
    o_ref[...] = (y + b2_ref[0, 0]).astype(o_ref.dtype)


def nn2_forward(x, w1, b1, w2, b2, *, block_rows=4096):
    """Fused NN2 forward.

    x:  (B, d_in)
    w1: (d_in, 125)   (pre-transposed torch layer1.weight)
    b1: (125,)
    w2: (125, 1)      (pre-transposed torch layer2.weight)
    b2: (1,)
    """
    B, d_in = x.shape
    H = w1.shape[1]
    Hp = _round_up(H, 128)                      # 125 -> 128, lane aligned

    # Rows per grid step: as large as allowed (per-step overhead dominates at d_in=32),
    # but capped at ~ceil(B/2) so v7x's two TensorCores both get work whenever B > 8.
    half = _round_up(max(1, -(-B // 2)), 8)
    tb = max(8, min(block_rows, half))
    n_tiles = pl.cdiv(B, tb)                    # partial last block handled by Pallas

    # ---- one-time, tiny weight layout prep (no full passes over x) ----
    w1_p = jnp.pad(w1, ((0, 0), (0, Hp - H))).astype(x.dtype)
    b1_p = jnp.pad(b1, (0, Hp - H)).reshape(1, Hp).astype(jnp.float32)
    # Padded hidden columns: sigmoid(0+0)=0.5 multiplies an exactly-zero w2 row -> no effect.
    w2_p = jnp.pad(w2, ((0, Hp - H), (0, 0))).astype(jnp.float32)       # (Hp, 1)
    b2_s = b2.reshape(1, 1).astype(jnp.float32)

    xb = jnp.dtype(x.dtype).itemsize
    cost = pl.CostEstimate(
        flops=2 * B * d_in * Hp + 2 * B * Hp,
        transcendentals=B * Hp,
        bytes_accessed=(B * d_in * xb            # x read
                        + d_in * Hp * xb         # w1 (once)
                        + 2 * Hp * 4             # b1 + w2
                        + B * 4),                # output write
    )

    out = pl.pallas_call(
        _nn2_kernel,
        out_shape=jax.ShapeDtypeStruct((B, 1), jnp.float32),
        grid=(n_tiles,),
        in_specs=[
            pl.BlockSpec((tb, d_in), lambda i: (i, 0)),          # streamed x tile
            pl.BlockSpec((d_in, Hp), lambda i: (0, 0)),          # resident w1
            pl.BlockSpec((1, Hp), lambda i: (0, 0)),             # resident b1 row
            pl.BlockSpec((Hp, 1), lambda i: (0, 0)),             # resident w2 column
            pl.BlockSpec(memory_space=pltpu.MemorySpace.SMEM),   # scalar b2
        ],
        out_specs=pl.BlockSpec((tb, 1), lambda i: (i, 0)),
        compiler_params=pltpu.CompilerParams(
            dimension_semantics=("parallel",),
        ),
        cost_estimate=cost,
    )(x, w1_p, b1_p, w2_p, b2_s)

    return out


def nn2_reference(x, w1, b1, w2, b2):
    h = jax.nn.sigmoid(x @ w1 + b1)
    return h @ w2 + b2


if __name__ == "__main__":
    key = jax.random.PRNGKey(0)
    D_IN, H = 32, 125

    k_x, k_w1, k_b1, k_w2, k_b2, k_x2 = jax.random.split(key, 6)

    # Deterministic init mimicking nn.Linear's uniform(-1/sqrt(fan_in), 1/sqrt(fan_in)).
    bound1 = 1.0 / float(D_IN) ** 0.5
    w1 = jax.random.uniform(k_w1, (D_IN, H), jnp.float32, -bound1, bound1)
    b1 = jax.random.uniform(k_b1, (H,), jnp.float32, -bound1, bound1)
    bound2 = 1.0 / float(H) ** 0.5
    w2 = jax.random.uniform(k_w2, (H, 1), jnp.float32, -bound2, bound2)
    b2 = jax.random.uniform(k_b2, (1,), jnp.float32, -bound2, bound2)

    # Case 1: small batch -> tb=8, two grid steps (both TensorCores get a tile on v7x).
    x_small = jax.random.normal(k_x, (16, D_IN), dtype=jnp.float32)
    out_small = nn2_forward(x_small, w1, b1, w2, b2)
    jax.block_until_ready(out_small)
    ref_small = nn2_reference(x_small, w1, b1, w2, b2)
    assert out_small.shape == (16, 1)
    assert jnp.allclose(out_small, ref_small, atol=1e-4, rtol=1e-4)

    # Case 2: batch not a multiple of the tile -> exercises the masked partial last block
    # (no wrapper-side pad pass over x).
    x_big = jax.random.normal(k_x2, (300, D_IN), dtype=jnp.float32)
    out_big = nn2_forward(x_big, w1, b1, w2, b2, block_rows=128)
    jax.block_until_ready(out_big)
    ref_big = nn2_reference(x_big, w1, b1, w2, b2)
    assert out_big.shape == (300, 1)
    assert jnp.allclose(out_big, ref_big, atol=1e-4, rtol=1e-4)

    print("KERNEL_OK")
</pallas_src>

<mosaic_0001>
module attributes {stable_mosaic.version = 11 : i64} {
  func.func @_nn2_kernel(%arg0: i32, %arg1: memref<8x32xf32, #tpu.memory_space<vmem>>, %arg2: memref<32x128xf32, #tpu.memory_space<vmem>>, %arg3: memref<1x128xf32, #tpu.memory_space<vmem>>, %arg4: memref<128x1xf32, #tpu.memory_space<vmem>>, %arg5: memref<1x1xf32, #tpu.memory_space<smem>>, %arg6: memref<8x1xf32, #tpu.memory_space<vmem>>) attributes {dimension_semantics = [#tpu.dimension_semantics<parallel>], iteration_bounds = array<i64: 2>, scalar_prefetch = 0 : i64, scratch_operands = 0 : i64, tpu.core_type = #tpu.core_type<tc>, window_params = [{transform_indices = @transform_0, window_bounds = array<i64: 8, 32>}, {pipeline_mode = #tpu.pipeline_mode<synchronous>, transform_indices = @transform_1, window_bounds = array<i64: 32, 128>}, {pipeline_mode = #tpu.pipeline_mode<synchronous>, transform_indices = @transform_2, window_bounds = array<i64: 1, 128>}, {pipeline_mode = #tpu.pipeline_mode<synchronous>, transform_indices = @transform_3, window_bounds = array<i64: 128, 1>}, {transform_indices = @transform_4, window_bounds = array<i64: 1, 1>}, {transform_indices = @transform_5, window_bounds = array<i64: 8, 1>}]} {
    %c0 = arith.constant 0 : index
    %c0_0 = arith.constant 0 : index
    %0 = vector.load %arg1[%c0, %c0_0] : memref<8x32xf32, #tpu.memory_space<vmem>>, vector<8x32xf32>
    %c0_1 = arith.constant 0 : index
    %c0_2 = arith.constant 0 : index
    %1 = vector.load %arg2[%c0_1, %c0_2] : memref<32x128xf32, #tpu.memory_space<vmem>>, vector<32x128xf32>
    %cst = arith.constant dense<0.000000e+00> : vector<8x128xf32>
    %2 = tpu.matmul %0, %1, %cst {dimension_numbers = #tpu.dot_dimension_numbers<[1], [0], [0], [1], [0, 0, 1, 1], [], []>} : vector<8x32xf32>, vector<32x128xf32>, vector<8x128xf32> -> vector<8x128xf32>
    %c0_3 = arith.constant 0 : index
    %c0_4 = arith.constant 0 : index
    %3 = vector.load %arg3[%c0_3, %c0_4] : memref<1x128xf32, #tpu.memory_space<vmem>>, vector<1x128xf32>
    %4 = vector.broadcast %3 : vector<1x128xf32> to vector<8x128xf32>
    %5 = arith.addf %2, %4 : vector<8x128xf32>
    %cst_5 = arith.constant 5.000000e-01 : f32
    %6 = vector.broadcast %cst_5 : f32 to vector<8x128xf32>
    %7 = arith.mulf %6, %5 : vector<8x128xf32>
    %8 = math.tanh %7 : vector<8x128xf32>
    %cst_6 = arith.constant 5.000000e-01 : f32
    %9 = vector.broadcast %cst_6 : f32 to vector<8x128xf32>
    %10 = arith.mulf %9, %8 : vector<8x128xf32>
    %cst_7 = arith.constant 5.000000e-01 : f32
    %11 = vector.broadcast %cst_7 : f32 to vector<8x128xf32>
    %12 = arith.addf %10, %11 : vector<8x128xf32>
    %c0_8 = arith.constant 0 : index
    %c0_9 = arith.constant 0 : index
    %13 = vector.load %arg4[%c0_8, %c0_9] : memref<128x1xf32, #tpu.memory_space<vmem>>, vector<128x1xf32>
    %cst_10 = arith.constant dense<0.000000e+00> : vector<8x1xf32>
    %14 = tpu.matmul %12, %13, %cst_10 {dimension_numbers = #tpu.dot_dimension_numbers<[1], [0], [0], [1], [0, 0, 1, 1], [], []>} : vector<8x128xf32>, vector<128x1xf32>, vector<8x1xf32> -> vector<8x1xf32>
    %c0_11 = arith.constant 0 : index
    %c0_12 = arith.constant 0 : index
    %15 = memref.load %arg5[%c0_11, %c0_12] : memref<1x1xf32, #tpu.memory_space<smem>>
    %16 = vector.broadcast %15 : f32 to vector<8x1xf32>
    %17 = arith.addf %14, %16 : vector<8x1xf32>
    %c0_13 = arith.constant 0 : index
    %c0_14 = arith.constant 0 : index
    %18 = vector.load %arg6[%c0_13, %c0_14] : memref<8x1xf32, #tpu.memory_space<vmem>>, vector<8x1xf32>
    tpu.vector_store %arg6[%c0_13, %c0_14], %17 {strides = array<i32>} : memref<8x1xf32, #tpu.memory_space<vmem>>, vector<8x1xf32>,
    return
  }
  func.func @transform_0(%arg0: i32) -> (i32, i32) {
    %c0_i32 = arith.constant 0 : i32
    %c0_i32_0 = arith.constant 0 : i32
    return %arg0, %c0_i32 : i32, i32
  }
  func.func @transform_1(%arg0: i32) -> (i32, i32) {
    %c0_i32 = arith.constant 0 : i32
    %c0_i32_0 = arith.constant 0 : i32
    %c0_i32_1 = arith.constant 0 : i32
    return %c0_i32, %c0_i32_0 : i32, i32
  }
  func.func @transform_2(%arg0: i32) -> (i32, i32) {
    %c0_i32 = arith.constant 0 : i32
    %c0_i32_0 = arith.constant 0 : i32
    %c0_i32_1 = arith.constant 0 : i32
    return %c0_i32, %c0_i32_0 : i32, i32
  }
  func.func @transform_3(%arg0: i32) -> (i32, i32) {
    %c0_i32 = arith.constant 0 : i32
    %c0_i32_0 = arith.constant 0 : i32
    %c0_i32_1 = arith.constant 0 : i32
    return %c0_i32, %c0_i32_0 : i32, i32
  }
  func.func @transform_4(%arg0: i32) -> (i32, i32) {
    %c0_i32 = arith.constant 0 : i32
    %c0_i32_0 = arith.constant 0 : i32
    %c0_i32_1 = arith.constant 0 : i32
    return %c0_i32, %c0_i32_0 : i32, i32
  }
  func.func @transform_5(%arg0: i32) -> (i32, i32) {
    %c0_i32 = arith.constant 0 : i32
    %c0_i32_0 = arith.constant 0 : i32
    return %arg0, %c0_i32 : i32, i32
  }
}

</mosaic_0001>

<llo_original>
// kernel: tpu_custom_call.1
$region0: #{tpu_custom_call.1}
  #allocation0 [shape = 'u32[]', space=smem, size = 0x4, offset = 0x4, fixed_abs, tag = 'smem constant byte address 0x4 - core index']
  #allocation1 [shape = 'u32[144,128]{1,0:T(1,128)}', space=vmem, size = 0x12000, scoped, tag = 'internal scratch']
  #allocation2 [shape = 'f32[1,1]{1,0:T(1,128)S(6)}', space=smem, size = 0x200, scoped, tag = 'scoped memory for tpu_custom_call.1']
  %s0 = inlined_call_operand.vmem [shape: f32[16,32], index: 0, kind: input, shape index: {}]
  %s1 = inlined_call_operand.vmem [shape: f32[32,128], index: 1, kind: input, shape index: {}]
  %s2 = inlined_call_operand.vmem [shape: f32[1,128], index: 2, kind: input, shape index: {}]
  %s3 = inlined_call_operand.vmem [shape: f32[128,1], index: 3, kind: input, shape index: {}]
  %s4 = inlined_call_operand.<no memory space> [shape: f32[1,1], index: 4, kind: input, shape index: {}]
  %s5 = inlined_call_operand.vmem [shape: f32[16,1], index: 5, kind: output, shape index: {}]
  %s6 = sld [smem:[#allocation0]]
  $region53: #{tpu_custom_call.1} parent=0
    _
  %s8 = ssub.s32 1, %s6
  %s9 = scalar_select 0, %s8, %s6
  %10 = sst [smem:[#allocation2]] %s4
  loop: start=0, step=1, limit=4
  $region2: #{tpu_custom_call.1} parent=0 // loop_pre_header
    _
  $region3: #{tpu_custom_call.1} parent=0 // loop_header
    %s12 = sphi 0, %s16
    %p13 = scmp.ge.s32.totalorder %s12, 4
    %s22 = sphi 0, %s24
    %s25 = sphi 0, %s22
    %s26 = sphi 0, %s25
    %s42 = sphi 0, %s26
    %s46 = sphi 0, %s46
    %s48 = sphi 0, %s46
    %s49 = sphi 0, %s48
    %s63 = sphi 0, %s49
    %s67 = sphi 0, %s67
    %s69 = sphi 0, %s67
    %s70 = sphi 0, %s69
    %s84 = sphi 0, %s70
    %s88 = sphi 0, %s88
    %s90 = sphi 0, %s88
    %s91 = sphi 0, %s90
    %s105 = sphi 0, %s91
    %s109 = sphi 0, %s109
    %s111 = sphi 0, %s109
    %s112 = sphi 0, %s111
    %s126 = sphi 0, %s112
    %s132 = sphi 0, %s134
    %s135 = sphi 0, %s132
    %s136 = sphi 0, %s135
    %s152 = sphi 0, %s136
  $region4: #{tpu_custom_call.1} parent=0 // loop_header_branch
    %15 = sbr.rel (%p13) target = $region8
  $region5: #{tpu_custom_call.1} parent=0 // loop_body
    %s17 = ssub.s32 %s12, 1
    %s18 = ssub.s32 %s12, 2
    %s19 = sadd.s32 %s12, 1
    %s20 = ssub.s32 %s12, %s19
    %p21 = scmp.eq.s32.totalorder %s20, 0
    %s23 = sadd.s32 %s22, 1
    %s24 = scalar_select %p21, %s22, %s23
    %p27 = pneg %p21
    %p28 = scmp.eq.s32.totalorder %s12, 1
    %p29 = por %p27, %p28
    %p30 = scmp.ne.s32.totalorder %s22, %s25
    %p31 = scmp.eq.s32.totalorder %s12, 0
    %p32 = por %p30, %p31
    %p33 = scmp.ne.s32.totalorder %s22, %s25
    %p34 = scmp.eq.s32.totalorder %s17, 1
    %p35 = por %p33, %p34
    %p36 = scmp.ne.s32.totalorder %s25, %s26
    %p37 = scmp.eq.s32.totalorder %s17, 0
    %p38 = por %p36, %p37
    %p39 = scmp.ne.s32.totalorder %s25, %s26
    %p40 = scmp.eq.s32.totalorder %s18, 1
    %p41 = por %p39, %p40
    %p43 = scmp.ne.s32.totalorder %s26, %s42
    %p44 = scmp.eq.s32.totalorder %s18, 0
    %p45 = por %p43, %p44
    %s47 = sadd.s32 %s46, 1
    %p50 = scmp.eq.s32.totalorder %s12, 1
    %p51 = scmp.ne.s32.totalorder %s46, %s48
    %p52 = scmp.eq.s32.totalorder %s12, 0
    %p53 = por %p51, %p52
    %p54 = scmp.ne.s32.totalorder %s46, %s48
    %p55 = scmp.eq.s32.totalorder %s17, 1
    %p56 = por %p54, %p55
    %p57 = scmp.ne.s32.totalorder %s48, %s49
    %p58 = scmp.eq.s32.totalorder %s17, 0
    %p59 = por %p57, %p58
    %p60 = scmp.ne.s32.totalorder %s48, %s49
    %p61 = scmp.eq.s32.totalorder %s18, 1
    %p62 = por %p60, %p61
    %p64 = scmp.ne.s32.totalorder %s49, %s63
    %p65 = scmp.eq.s32.totalorder %s18, 0
    %p66 = por %p64, %p65
    %s68 = sadd.s32 %s67, 1
    %p71 = scmp.eq.s32.totalorder %s12, 1
    %p72 = scmp.ne.s32.totalorder %s67, %s69
    %p73 = scmp.eq.s32.totalorder %s12, 0
    %p74 = por %p72, %p73
    %p75 = scmp.ne.s32.totalorder %s67, %s69
    %p76 = scmp.eq.s32.totalorder %s17, 1
    %p77 = por %p75, %p76
    %p78 = scmp.ne.s32.totalorder %s69, %s70
    %p79 = scmp.eq.s32.totalorder %s17, 0
    %p80 = por %p78, %p79
    %p81 = scmp.ne.s32.totalorder %s69, %s70
    %p82 = scmp.eq.s32.totalorder %s18, 1
    %p83 = por %p81, %p82
    %p85 = scmp.ne.s32.totalorder %s70, %s84
    %p86 = scmp.eq.s32.totalorder %s18, 0
    %p87 = por %p85, %p86
    %s89 = sadd.s32 %s88, 1
    %p92 = scmp.eq.s32.totalorder %s12, 1
    %p93 = scmp.ne.s32.totalorder %s88, %s90
    %p94 = scmp.eq.s32.totalorder %s12, 0
    %p95 = por %p93, %p94
    %p96 = scmp.ne.s32.totalorder %s88, %s90
    %p97 = scmp.eq.s32.totalorder %s17, 1
    %p98 = por %p96, %p97
    %p99 = scmp.ne.s32.totalorder %s90, %s91
    %p100 = scmp.eq.s32.totalorder %s17, 0
    %p101 = por %p99, %p100
    %p102 = scmp.ne.s32.totalorder %s90, %s91
    %p103 = scmp.eq.s32.totalorder %s18, 1
    %p104 = por %p102, %p103
    %p106 = scmp.ne.s32.totalorder %s91, %s105
    %p107 = scmp.eq.s32.totalorder %s18, 0
    %p108 = por %p106, %p107
    %s110 = sadd.s32 %s109, 1
    %p113 = scmp.eq.s32.totalorder %s12, 1
    %p114 = scmp.ne.s32.totalorder %s109, %s111
    %p115 = scmp.eq.s32.totalorder %s12, 0
    %p116 = por %p114, %p115
    %p117 = scmp.ne.s32.totalorder %s109, %s111
    %p118 = scmp.eq.s32.totalorder %s17, 1
    %p119 = por %p117, %p118
    %p120 = scmp.ne.s32.totalorder %s111, %s112
    %p121 = scmp.eq.s32.totalorder %s17, 0
    %p122 = por %p120, %p121
    %p123 = scmp.ne.s32.totalorder %s111, %s112
    %p124 = scmp.eq.s32.totalorder %s18, 1
    %p125 = por %p123, %p124
    %p127 = scmp.ne.s32.totalorder %s112, %s126
    %p128 = scmp.eq.s32.totalorder %s18, 0
    %p129 = por %p127, %p128
    %s130 = ssub.s32 %s12, %s19
    %p131 = scmp.eq.s32.totalorder %s130, 0
    %s133 = sadd.s32 %s132, 1
    %s134 = scalar_select %p131, %s132, %s133
    %p137 = pneg %p131
    %p138 = scmp.eq.s32.totalorder %s12, 1
    %p139 = por %p137, %p138
    %p140 = scmp.ne.s32.totalorder %s132, %s135
    %p141 = scmp.eq.s32.totalorder %s12, 0
    %p142 = por %p140, %p141
    %p143 = scmp.ne.s32.totalorder %s132, %s135
    %p144 = scmp.eq.s32.totalorder %s17, 1
    %p145 = por %p143, %p144
    %p146 = scmp.ne.s32.totalorder %s135, %s136
    %p147 = scmp.eq.s32.totalorder %s17, 0
    %p148 = por %p146, %p147
    %p149 = scmp.ne.s32.totalorder %s135, %s136
    %p150 = scmp.eq.s32.totalorder %s18, 1
    %p151 = por %p149, %p150
    %p153 = scmp.ne.s32.totalorder %s136, %s152
    %p154 = scmp.eq.s32.totalorder %s18, 0
    %p155 = por %p153, %p154
    %p156 = scmp.le.s32.totalorder 1, %s12
    %p157 = scmp.lt.s32.totalorder %s12, 3
    %p158 = pnand %p156, %p157
    %p159 = pneg %p158
    // Predicated region
    $region9: #{tpu_custom_call.1} parent=5 // pred_check
      _
    $region10: #{tpu_custom_call.1} parent=5 // pred_check_branch
      %161 = sbr.rel (%p158) target = $region12
    $region11: #{tpu_custom_call.1} parent=5 // pred_region
      %s162 = ssub.s32 %s12, 1
      // Predicated region
      $region13: #{tpu_custom_call.1} parent=11 // pred_check
        %p163 = pneg %p59
      $region14: #{tpu_custom_call.1} parent=11 // pred_check_branch
        %165 = sbr.rel (%p163) target = $region16
      $region15: #{tpu_custom_call.1} parent=11 // pred_region
        _
      $region16: #{tpu_custom_call.1} parent=11 // pred_fallthru
        _
      // Predicated region
      $region17: #{tpu_custom_call.1} parent=11 // pred_check
        %p166 = pneg %p80
      $region18: #{tpu_custom_call.1} parent=11 // pred_check_branch
        %168 = sbr.rel (%p166) target = $region20
      $region19: #{tpu_custom_call.1} parent=11 // pred_region
        _
      $region20: #{tpu_custom_call.1} parent=11 // pred_fallthru
        _
      // Predicated region
      $region21: #{tpu_custom_call.1} parent=11 // pred_check
        %p169 = pneg %p101
      $region22: #{tpu_custom_call.1} parent=11 // pred_check_branch
        %171 = sbr.rel (%p169) target = $region24
      $region23: #{tpu_custom_call.1} parent=11 // pred_region
        _
      $region24: #{tpu_custom_call.1} parent=11 // pred_fallthru
        _
      // Predicated region
      $region25: #{tpu_custom_call.1} parent=11 // pred_check
        %p172 = pneg %p122
      $region26: #{tpu_custom_call.1} parent=11 // pred_check_branch
        %174 = sbr.rel (%p172) target = $region28
      $region27: #{tpu_custom_call.1} parent=11 // pred_region
        _
      $region28: #{tpu_custom_call.1} parent=11 // pred_fallthru
        _
    $region12: #{tpu_custom_call.1} parent=5 // pred_fallthru
      _
    %p175 = scmp.lt.s32.totalorder %s12, 2
    // Predicated region
    $region29: #{tpu_custom_call.1} parent=5 // pred_check
      %p176 = pneg %p175
    $region30: #{tpu_custom_call.1} parent=5 // pred_check_branch
      %178 = sbr.rel (%p176) target = $region32
    $region31: #{tpu_custom_call.1} parent=5 // pred_region
      // Predicated region
      $region33: #{tpu_custom_call.1} parent=31 // pred_check
        %p179 = pneg %p32
      $region34: #{tpu_custom_call.1} parent=31 // pred_check_branch
        %181 = sbr.rel (%p179) target = $region36
      $region35: #{tpu_custom_call.1} parent=31 // pred_region
        %p182 = scmp.lt.s32.totalorder %s12, 1
        %s183 = scalar_select %p182, %s12, 1
        %s184 = smul.addr %s183, 8
        %s185 = scalar_lea.vmem %s0, %s184
      $region36: #{tpu_custom_call.1} parent=31 // pred_fallthru
        _
    $region32: #{tpu_custom_call.1} parent=5 // pred_fallthru
      _
    %p186 = scmp.le.s32.totalorder 1, %s12
    %p187 = scmp.lt.s32.totalorder %s12, 3
    %p188 = pnand %p186, %p187
    %p189 = pneg %p188
    // Predicated region
    $region37: #{tpu_custom_call.1} parent=5 // pred_check
      _
    $region38: #{tpu_custom_call.1} parent=5 // pred_check_branch
      %191 = sbr.rel (%p188) target = $region40
    $region39: #{tpu_custom_call.1} parent=5 // pred_region
      %s192 = ssub.s32 %s12, 1
      %p193 = scmp.lt.s32.totalorder %s17, 1
      %s194 = scalar_select %p193, %s17, 1
      %s195 = smul.addr %s194, 8
      %s196 = scalar_lea.vmem %s0, %s195
      %p197 = pneg %p38
      %p198 = pneg %p35
      %p199 = pneg %p59
      %p200 = pneg %p56
      %p201 = pneg %p80
      %p202 = pneg %p77
      %p203 = pneg %p101
      %p204 = pneg %p98
      %p205 = pneg %p122
      %p206 = pneg %p119
      %p207 = pneg %p148
      %p208 = pneg %p145
      %p209 = scmp.lt.s32.totalorder %s17, 1
      %s210 = scalar_select %p209, %s17, 1
      %s211 = smul.addr %s210, 8
      %s212 = scalar_lea.vmem %s5, %s211
      %p213 = scmp.lt.s32.totalorder %s17, 1
      %s214 = scalar_select %p213, %s17, 1
      %s215 = smul.addr %s214, 8
      %s216 = scalar_lea.vmem %s0, %s215
      %p217 = scmp.lt.s32.totalorder %s17, 1
      %s218 = scalar_select %p217, %s17, 1
      %s219 = smul.addr %s218, 8
      %s220 = scalar_lea.vmem %s5, %s219
      %v221 = vld [vmem:[%s216] sm:$0xff]
      %v222 = vld [vmem:[%s1] sm:$0xff]
      %v223 = vld [vmem:[%s1 + $0x8] sm:$0xff]
      %v224 = vld [vmem:[%s1 + $0x10] sm:$0xff]
      %v225 = vld [vmem:[%s1 + $0x18] sm:$0xff]
      %v226 = vld [vmem:[%s2] sm:$0x1]
      %v228 = vlaneseq
      %v229 = vshrl.u32 %v228, 7
      %v230 = vsub.s32 0, %v229
      %v231 = vrot.slane %v226, %v230
      %vm233 = vcmask 261120
      %v235 = vsel %vm233, %v221, 0
      %237 = vmatprep.subr.mxu0 0.0
      %238 = vmatpush1.msra.mxu0 0.0
      %239 = vmatprep.subr.mxu0 0.0
      %240 = vmatpush1.msra.mxu0 0.0
      %241 = vmatprep.subr.mxu0 0.0
      %242 = vmatpush1.msra.mxu0 0.0
      %243 = vmatprep.subr.mxu0 0.0
      %244 = vmatpush1.msra.mxu0 0.0
      %245 = vmatprep.subr.mxu0 0.0
      %246 = vmatpush1.msra.mxu0 0.0
      %247 = vmatprep.subr.mxu0 0.0
      %248 = vmatpush1.msra.mxu0 0.0
      %249 = vmatprep.subr.mxu0 0.0
      %250 = vmatpush1.msra.mxu0 0.0
      %251 = vmatprep.subr.mxu0 0.0
      %252 = vmatpush1.msra.mxu0 0.0
      %253 = vmatprep.subr.mxu0 0.0
      %254 = vmatpush1.msra.mxu0 0.0
      %255 = vmatprep.subr.mxu0 0.0
      %256 = vmatpush1.msra.mxu0 0.0
      %257 = vmatprep.subr.mxu0 0.0
      %258 = vmatpush1.msra.mxu0 0.0
      %259 = vmatprep.subr.mxu0 0.0
      %260 = vmatpush1.msra.mxu0 0.0
      %261 = vmatprep.subr.mxu0 0.0
      %262 = vmatpush1.msra.mxu0 %v225
      %263 = vmatprep.subr.mxu0 0.0
      %264 = vmatpush1.msra.mxu0 %v224
      %265 = vmatprep.subr.mxu0 0.0
      %266 = vmatpush1.msra.mxu0 %v223
      %267 = vmatprep.subr.mxu0 0.0
      %268 = vmatpush1.msra.mxu0 %v222
      %269 = vmatprep.subr.mxu0 0.0
      %270 = vmatpush2.msra.mxu0 0.0
      %271 = vmatprep.subr.mxu0 0.0
      %272 = vmatpush2.msra.mxu0 0.0
      %273 = vmatprep.subr.mxu0 0.0
      %274 = vmatpush2.msra.mxu0 0.0
      %275 = vmatprep.subr.mxu0 0.0
      %276 = vmatpush2.msra.mxu0 0.0
      %277 = vmatprep.subr.mxu0 0.0
      %278 = vmatpush2.msra.mxu0 0.0
      %279 = vmatprep.subr.mxu0 0.0
      %280 = vmatpush2.msra.mxu0 0.0
      %281 = vmatprep.subr.mxu0 0.0
      %282 = vmatpush2.msra.mxu0 0.0
      %283 = vmatprep.subr.mxu0 0.0
      %284 = vmatpush2.msra.mxu0 0.0
      %285 = vmatprep.subr.mxu0 0.0
      %286 = vmatpush2.msra.mxu0 0.0
      %287 = vmatprep.subr.mxu0 0.0
      %288 = vmatpush2.msra.mxu0 0.0
      %289 = vmatprep.subr.mxu0 0.0
      %290 = vmatpush2.msra.mxu0 0.0
      %291 = vmatprep.subr.mxu0 0.0
      %292 = vmatpush2.msra.mxu0 0.0
      %293 = vmatprep.subr.mxu0 0.0
      %294 = vmatpush2.msra.mxu0 0.0
      %295 = vmatprep.subr.mxu0 0.0
      %296 = vmatpush2.msra.mxu0 0.0
      %297 = vmatprep.subr.mxu0 0.0
      %298 = vmatpush2.msra.mxu0 0.0
      %299 = vmatprep.subr.mxu0 0.0
      %300 = vmatpush2.msra.mxu0 0.0
      %301 = vmatprep.mubr.f32.mxu0 0.0
      %302 = vmatmul.mubr.f32.gmra.mxu0 %v235
      %v303 = vpop.f32.mrf.mxu0
      %v304 = vadd.f32 %v231, %v303
      %v305 = vpop.f32.mrf.mxu0
      %306 = vdwg.mxu0
      %v307 = vmul.f32 %v304, 0.5
      %v308 = vtanh.pop %v307
      %v309 = vmul.f32 %v308, 0.5
      %v310 = vadd.f32 %v309, 0.5
      %v311 = vld [vmem:[%s3] sm:$0xff]
      %v312 = vld [vmem:[%s3 + $0x8] sm:$0xff]
      %v313 = vld [vmem:[%s3 + $0x10] sm:$0xff]
      %v314 = vld [vmem:[%s3 + $0x18] sm:$0xff]
      %v315 = vld [vmem:[%s3 + $0x20] sm:$0xff]
      %v316 = vld [vmem:[%s3 + $0x28] sm:$0xff]
      %v317 = vld [vmem:[%s3 + $0x30] sm:$0xff]
      %v318 = vld [vmem:[%s3 + $0x38] sm:$0xff]
      %v319 = vld [vmem:[%s3 + $0x40] sm:$0xff]
      %v320 = vld [vmem:[%s3 + $0x48] sm:$0xff]
      %v321 = vld [vmem:[%s3 + $0x50] sm:$0xff]
      %v322 = vld [vmem:[%s3 + $0x58] sm:$0xff]
      %v323 = vld [vmem:[%s3 + $0x60] sm:$0xff]
      %v324 = vld [vmem:[%s3 + $0x68] sm:$0xff]
      %v325 = vld [vmem:[%s3 + $0x70] sm:$0xff]
      %v326 = vld [vmem:[%s3 + $0x78] sm:$0xff]
      %s327 = sld [smem:[#allocation2]]
      %v328 = vstv %s327
      %329 = vmatprep.subr.mxu0 0.0
      %330 = vmatpush1.msra.mxu0 %v326
      %331 = vmatprep.subr.mxu0 0.0
      %332 = vmatpush1.msra.mxu0 %v325
      %333 = vmatprep.subr.mxu0 0.0
      %334 = vmatpush1.msra.mxu0 %v324
      %335 = vmatprep.subr.mxu0 0.0
      %336 = vmatpush1.msra.mxu0 %v323
      %337 = vmatprep.subr.mxu0 0.0
      %338 = vmatpush1.msra.mxu0 %v322
      %339 = vmatprep.subr.mxu0 0.0
      %340 = vmatpush1.msra.mxu0 %v321
      %341 = vmatprep.subr.mxu0 0.0
      %342 = vmatpush1.msra.mxu0 %v320
      %343 = vmatprep.subr.mxu0 0.0
      %344 = vmatpush1.msra.mxu0 %v319
      %345 = vmatprep.subr.mxu0 0.0
      %346 = vmatpush1.msra.mxu0 %v318
      %347 = vmatprep.subr.mxu0 0.0
      %348 = vmatpush1.msra.mxu0 %v317
      %349 = vmatprep.subr.mxu0 0.0
      %350 = vmatpush1.msra.mxu0 %v316
      %351 = vmatprep.subr.mxu0 0.0
      %352 = vmatpush1.msra.mxu0 %v315
      %353 = vmatprep.subr.mxu0 0.0
      %354 = vmatpush1.msra.mxu0 %v314
      %355 = vmatprep.subr.mxu0 0.0
      %356 = vmatpush1.msra.mxu0 %v313
      %357 = vmatprep.subr.mxu0 0.0
      %358 = vmatpush1.msra.mxu0 %v312
      %359 = vmatprep.subr.mxu0 0.0
      %360 = vmatpush1.msra.mxu0 %v311
      %361 = vmatprep.subr.mxu0 0.0
      %362 = vmatpush2.msra.mxu0 0.0
      %363 = vmatprep.subr.mxu0 0.0
      %364 = vmatpush2.msra.mxu0 0.0
      %365 = vmatprep.subr.mxu0 0.0
      %366 = vmatpush2.msra.mxu0 0.0
      %367 = vmatprep.subr.mxu0 0.0
      %368 = vmatpush2.msra.mxu0 0.0
      %369 = vmatprep.subr.mxu0 0.0
      %370 = vmatpush2.msra.mxu0 0.0
      %371 = vmatprep.subr.mxu0 0.0
      %372 = vmatpush2.msra.mxu0 0.0
      %373 = vmatprep.subr.mxu0 0.0
      %374 = vmatpush2.msra.mxu0 0.0
      %375 = vmatprep.subr.mxu0 0.0
      %376 = vmatpush2.msra.mxu0 0.0
      %377 = vmatprep.subr.mxu0 0.0
      %378 = vmatpush2.msra.mxu0 0.0
      %379 = vmatprep.subr.mxu0 0.0
      %380 = vmatpush2.msra.mxu0 0.0
      %381 = vmatprep.subr.mxu0 0.0
      %382 = vmatpush2.msra.mxu0 0.0
      %383 = vmatprep.subr.mxu0 0.0
      %384 = vmatpush2.msra.mxu0 0.0
      %385 = vmatprep.subr.mxu0 0.0
      %386 = vmatpush2.msra.mxu0 0.0
      %387 = vmatprep.subr.mxu0 0.0
      %388 = vmatpush2.msra.mxu0 0.0
      %389 = vmatprep.subr.mxu0 0.0
      %390 = vmatpush2.msra.mxu0 0.0
      %391 = vmatprep.subr.mxu0 0.0
      %392 = vmatpush2.msra.mxu0 0.0
      %393 = vmatprep.mubr.f32.mxu0 0.0
      %394 = vmatmul.mubr.f32.gmra.mxu0 %v310
      %v395 = vpop.f32.mrf.mxu0
      %v396 = vadd.f32 %v328, %v395
      %v397 = vpop.f32.mrf.mxu0
      %398 = vdwg.mxu0
      %vm399 = vcmask 7168
      %400 = vst.msk [vmem:[%s220] sm:$0xff] %vm399, %v396
      %p401 = scmp.lt.s32.totalorder %s17, 1
      %s402 = scalar_select %p401, %s17, 1
      %s403 = smul.addr %s402, 8
      %s404 = scalar_lea.vmem %s5, %s403
      // Predicated region
      $region41: #{tpu_custom_call.1} parent=39 // pred_check
        %p405 = pneg %p145
      $region42: #{tpu_custom_call.1} parent=39 // pred_check_branch
        %407 = sbr.rel (%p405) target = $region44
      $region43: #{tpu_custom_call.1} parent=39 // pred_region
        _
      $region44: #{tpu_custom_call.1} parent=39 // pred_fallthru
        _
    $region40: #{tpu_custom_call.1} parent=5 // pred_fallthru
      _
    %p408 = scmp.le.s32.totalorder 2, %s12
    // Predicated region
    $region45: #{tpu_custom_call.1} parent=5 // pred_check
      %p409 = pneg %p408
    $region46: #{tpu_custom_call.1} parent=5 // pred_check_branch
      %411 = sbr.rel (%p409) target = $region48
    $region47: #{tpu_custom_call.1} parent=5 // pred_region
      %s412 = ssub.s32 %s12, 2
      // Predicated region
      $region49: #{tpu_custom_call.1} parent=47 // pred_check
        %p413 = pneg %p151
      $region50: #{tpu_custom_call.1} parent=47 // pred_check_branch
        %415 = sbr.rel (%p413) target = $region52
      $region51: #{tpu_custom_call.1} parent=47 // pred_region
        %p416 = scmp.lt.s32.totalorder %s18, 1
        %s417 = scalar_select %p416, %s18, 1
        %s418 = smul.addr %s417, 8
        %s419 = scalar_lea.vmem %s5, %s418
      $region52: #{tpu_custom_call.1} parent=47 // pred_fallthru
        _
    $region48: #{tpu_custom_call.1} parent=5 // pred_fallthru
      _
  $region6: #{tpu_custom_call.1} parent=0 // loop_footer
    %s16 = sadd.s32 1, %s12
  $region7: #{tpu_custom_call.1} parent=0 // loop_footer_branch
    %11 = sbr.rel target = $region3
  $region8: #{tpu_custom_call.1} parent=0 // loop_exit
    _

</llo_original>
